<compile_context>
chip_gen: v5e
topology: v5e:2x2
jax: 0.10.0
libtpu: 0.0.40
codegen_flags: <defaults>
</compile_context>

<pallas_src>
import math

import jax
import jax.numpy as jnp
from jax.experimental import pallas as pl
from jax.experimental.pallas import tpu as pltpu


def _time_embedding_kernel(t_ref, freq_ref, phase_ref, w1_ref, b1_ref,
                           w2_ref, b2_ref, o_ref):
    # t_ref: [TB, 1] f32; freq_ref / phase_ref: [1, K] f32 (K = time_dim // 4)
    # Fused sinusoidal embedding: concat([sin(x), cos(x)]) == sin(x_cat + phase)
    arg = t_ref[...] * freq_ref[...] + phase_ref[...]            # [TB, K] f32
    emb = jnp.sin(arg)                                           # f32 (EUP)

    # Linear(K -> N): bf16 MXU operands, f32 accumulation.
    h = (jnp.dot(emb.astype(jnp.bfloat16), w1_ref[...],
                 preferred_element_type=jnp.float32)
         + b1_ref[...])                                          # [TB, N] f32

    # SiLU in f32 (keep VPU/EUP math f32; only downcast at dot operands).
    h = h * jax.nn.sigmoid(h)

    # Linear(N -> N)
    out = (jnp.dot(h.astype(jnp.bfloat16), w2_ref[...],
                   preferred_element_type=jnp.float32)
           + b2_ref[...])                                        # [TB, N] f32
    o_ref[...] = out.astype(o_ref.dtype)


def time_embedding(t, params, time_dim, *, block_b=8):
    """t: [B] timestep indices -> [B, time_dim] float32 embedding."""
    if time_dim % 8 != 0:
        raise ValueError("time_dim must be a multiple of 8")
    half = time_dim // 8
    if half < 2:
        # log(10000)/(half-1) divides by zero for time_dim == 8.
        raise ValueError("time_dim must be >= 16")
    K = time_dim // 4

    w1, b1, w2, b2 = params
    assert w1.shape == (K, time_dim), "w1 must be [time_dim//4, time_dim]"
    assert w2.shape == (time_dim, time_dim)

    B = t.shape[0]
    # Lane-dense feature width: pad N up to a multiple of 128 (unmasked vst).
    n_pad_to = max(128, ((time_dim + 127) // 128) * 128)
    pad_n = n_pad_to - time_dim
    # Batch padded to a multiple of the batch tile.
    b_pad_to = ((B + block_b - 1) // block_b) * block_b

    # Sinusoidal frequency table (same formula as the PyTorch module), with
    # the phase trick folding sin/cos into a single sin.
    emb_scale = math.log(10000.0) / (half - 1)
    freqs = jnp.exp(jnp.arange(half, dtype=jnp.float32) * -emb_scale)
    freq_cat = jnp.concatenate([freqs, freqs]).reshape(1, K)
    phase_cat = jnp.concatenate(
        [jnp.zeros((half,), jnp.float32),
         jnp.full((half,), jnp.pi / 2, jnp.float32)]).reshape(1, K)

    # bf16 weights (native MXU input), zero-padded to the lane-dense width.
    w1p = jnp.pad(w1, ((0, 0), (0, pad_n))).astype(jnp.bfloat16)
    w2p = jnp.pad(w2, ((0, pad_n), (0, pad_n))).astype(jnp.bfloat16)
    b1p = jnp.pad(b1.astype(jnp.float32), (0, pad_n)).reshape(1, n_pad_to)
    b2p = jnp.pad(b2.astype(jnp.float32), (0, pad_n)).reshape(1, n_pad_to)

    # NOTE: float32 cast of t loses integer precision above 2**24 — fine for
    # DDIM timestep indices.
    t_f = jnp.pad(t.astype(jnp.float32), (0, b_pad_to - B)).reshape(b_pad_to, 1)

    grid = (b_pad_to // block_b,)
    const = lambda i: (0, 0)

    cost = pl.CostEstimate(
        flops=2 * b_pad_to * K * n_pad_to + 2 * b_pad_to * n_pad_to * n_pad_to,
        transcendentals=b_pad_to * (K + n_pad_to),
        bytes_accessed=(w1p.size + w2p.size) * 2
        + (b1p.size + b2p.size) * 4
        + b_pad_to * 4
        + b_pad_to * n_pad_to * 4,
    )

    out = pl.pallas_call(
        _time_embedding_kernel,
        out_shape=jax.ShapeDtypeStruct((b_pad_to, n_pad_to), jnp.float32),
        grid=grid,
        in_specs=[
            pl.BlockSpec((block_b, 1), lambda i: (i, 0)),        # t (tiled)
            pl.BlockSpec((1, K), const),                         # freq_cat
            pl.BlockSpec((1, K), const),                         # phase_cat
            pl.BlockSpec((K, n_pad_to), const),                  # w1 (resident)
            pl.BlockSpec((1, n_pad_to), const),                  # b1
            pl.BlockSpec((n_pad_to, n_pad_to), const),           # w2 (resident)
            pl.BlockSpec((1, n_pad_to), const),                  # b2
        ],
        out_specs=pl.BlockSpec((block_b, n_pad_to), lambda i: (i, 0)),
        compiler_params=pltpu.CompilerParams(
            dimension_semantics=("parallel",),
        ),
        cost_estimate=cost,
    )(t_f, freq_cat, phase_cat, w1p, b1p, w2p, b2p)

    # Strip batch + feature padding.
    return out[:B, :time_dim]


def time_embedding_reference(t, params, time_dim):
    """Pure-JAX f32 reference mirroring the PyTorch forward exactly."""
    half = time_dim // 8
    emb = jnp.log(jnp.float32(10000.0)) / (half - 1)
    emb = jnp.exp(jnp.arange(half, dtype=jnp.float32) * -emb)
    emb = t[:, None].astype(jnp.float32) * emb[None, :]
    emb = jnp.concatenate([jnp.sin(emb), jnp.cos(emb)], axis=1)
    w1, b1, w2, b2 = params
    h = emb @ w1 + b1
    h = h * jax.nn.sigmoid(h)
    return h @ w2 + b2


def init_params(key, time_dim):
    in_dim = time_dim // 4
    k1, k2, k3, k4 = jax.random.split(key, 4)
    w1 = 0.05 * jax.random.normal(k1, (in_dim, time_dim), jnp.float32)
    b1 = 0.05 * jax.random.normal(k2, (time_dim,), jnp.float32)
    w2 = 0.05 * jax.random.normal(k3, (time_dim, time_dim), jnp.float32)
    b2 = 0.05 * jax.random.normal(k4, (time_dim,), jnp.float32)
    return (w1, b1, w2, b2)


if __name__ == "__main__":
    # NOTE: at this toy scale the kernel is pure per-call overhead; in a real
    # model this op should be fused into its consumer.  The structure above
    # (batch grid + resident weights + lane-dense padding) is what scales.
    time_dim = 32          # sinusoidal embedding dim = time_dim // 4 = 8
    batch = 16             # two grid steps with block_b = 8

    key = jax.random.PRNGKey(0)
    k_param, k_t = jax.random.split(key)
    params = init_params(k_param, time_dim)
    t = jax.random.randint(k_t, (batch,), 0, 1000)       # timestep indices [B]

    out = time_embedding(t, params, time_dim, block_b=8)
    out = jax.block_until_ready(out)

    ref = time_embedding_reference(t, params, time_dim)
    assert out.shape == (batch, time_dim)
    # bf16 matmul operands (f32 accumulation) vs f32 reference -> loose tol.
    assert jnp.allclose(out, ref, atol=1e-2, rtol=1e-2), (
        "mismatch vs reference: max abs err = "
        f"{float(jnp.max(jnp.abs(out - ref)))}")

    print("KERNEL_OK")
</pallas_src>

<mosaic_0001>
module attributes {stable_mosaic.version = 11 : i64} {
  func.func @_time_embedding_kernel(%arg0: i32, %arg1: memref<8x1xf32, #tpu.memory_space<vmem>>, %arg2: memref<1x8xf32, #tpu.memory_space<vmem>>, %arg3: memref<1x8xf32, #tpu.memory_space<vmem>>, %arg4: memref<8x128xbf16, #tpu.memory_space<vmem>>, %arg5: memref<1x128xf32, #tpu.memory_space<vmem>>, %arg6: memref<128x128xbf16, #tpu.memory_space<vmem>>, %arg7: memref<1x128xf32, #tpu.memory_space<vmem>>, %arg8: memref<8x128xf32, #tpu.memory_space<vmem>>) attributes {dimension_semantics = [#tpu.dimension_semantics<parallel>], iteration_bounds = array<i64: 2>, scalar_prefetch = 0 : i64, scratch_operands = 0 : i64, tpu.core_type = #tpu.core_type<tc>, window_params = [{transform_indices = @transform_0, window_bounds = array<i64: 8, 1>}, {pipeline_mode = #tpu.pipeline_mode<synchronous>, transform_indices = @transform_1, window_bounds = array<i64: 1, 8>}, {pipeline_mode = #tpu.pipeline_mode<synchronous>, transform_indices = @transform_2, window_bounds = array<i64: 1, 8>}, {pipeline_mode = #tpu.pipeline_mode<synchronous>, transform_indices = @transform_3, window_bounds = array<i64: 8, 128>}, {pipeline_mode = #tpu.pipeline_mode<synchronous>, transform_indices = @transform_4, window_bounds = array<i64: 1, 128>}, {pipeline_mode = #tpu.pipeline_mode<synchronous>, transform_indices = @transform_5, window_bounds = array<i64: 128, 128>}, {pipeline_mode = #tpu.pipeline_mode<synchronous>, transform_indices = @transform_6, window_bounds = array<i64: 1, 128>}, {transform_indices = @transform_7, window_bounds = array<i64: 8, 128>}]} {
    %c0 = arith.constant 0 : index
    %c0_0 = arith.constant 0 : index
    %0 = vector.load %arg1[%c0, %c0_0] : memref<8x1xf32, #tpu.memory_space<vmem>>, vector<8x1xf32>
    %c0_1 = arith.constant 0 : index
    %c0_2 = arith.constant 0 : index
    %1 = vector.load %arg2[%c0_1, %c0_2] : memref<1x8xf32, #tpu.memory_space<vmem>>, vector<1x8xf32>
    %2 = vector.broadcast %0 : vector<8x1xf32> to vector<8x8xf32>
    %3 = vector.broadcast %1 : vector<1x8xf32> to vector<8x8xf32>
    %4 = arith.mulf %2, %3 : vector<8x8xf32>
    %c0_3 = arith.constant 0 : index
    %c0_4 = arith.constant 0 : index
    %5 = vector.load %arg3[%c0_3, %c0_4] : memref<1x8xf32, #tpu.memory_space<vmem>>, vector<1x8xf32>
    %6 = vector.broadcast %5 : vector<1x8xf32> to vector<8x8xf32>
    %7 = arith.addf %4, %6 : vector<8x8xf32>
    %8 = math.sin %7 : vector<8x8xf32>
    %9 = arith.truncf %8 : vector<8x8xf32> to vector<8x8xbf16>
    %c0_5 = arith.constant 0 : index
    %c0_6 = arith.constant 0 : index
    %10 = vector.load %arg4[%c0_5, %c0_6] : memref<8x128xbf16, #tpu.memory_space<vmem>>, vector<8x128xbf16>
    %cst = arith.constant dense<0.000000e+00> : vector<8x128xf32>
    %11 = tpu.matmul %9, %10, %cst {dimension_numbers = #tpu.dot_dimension_numbers<[1], [0], [0], [1], [0, 0, 1, 1], [], []>} : vector<8x8xbf16>, vector<8x128xbf16>, vector<8x128xf32> -> vector<8x128xf32>
    %c0_7 = arith.constant 0 : index
    %c0_8 = arith.constant 0 : index
    %12 = vector.load %arg5[%c0_7, %c0_8] : memref<1x128xf32, #tpu.memory_space<vmem>>, vector<1x128xf32>
    %13 = vector.broadcast %12 : vector<1x128xf32> to vector<8x128xf32>
    %14 = arith.addf %11, %13 : vector<8x128xf32>
    %15 = arith.negf %14 : vector<8x128xf32>
    %16 = math.exp %15 : vector<8x128xf32>
    %cst_9 = arith.constant 1.000000e+00 : f32
    %17 = vector.broadcast %cst_9 : f32 to vector<8x128xf32>
    %18 = arith.addf %17, %16 : vector<8x128xf32>
    %19 = arith.divf %17, %18 : vector<8x128xf32>
    %20 = arith.mulf %14, %19 : vector<8x128xf32>
    %21 = arith.truncf %20 : vector<8x128xf32> to vector<8x128xbf16>
    %c0_10 = arith.constant 0 : index
    %c0_11 = arith.constant 0 : index
    %22 = vector.load %arg6[%c0_10, %c0_11] : memref<128x128xbf16, #tpu.memory_space<vmem>>, vector<128x128xbf16>
    %cst_12 = arith.constant dense<0.000000e+00> : vector<8x128xf32>
    %23 = tpu.matmul %21, %22, %cst_12 {dimension_numbers = #tpu.dot_dimension_numbers<[1], [0], [0], [1], [0, 0, 1, 1], [], []>} : vector<8x128xbf16>, vector<128x128xbf16>, vector<8x128xf32> -> vector<8x128xf32>
    %c0_13 = arith.constant 0 : index
    %c0_14 = arith.constant 0 : index
    %24 = vector.load %arg7[%c0_13, %c0_14] : memref<1x128xf32, #tpu.memory_space<vmem>>, vector<1x128xf32>
    %25 = vector.broadcast %24 : vector<1x128xf32> to vector<8x128xf32>
    %26 = arith.addf %23, %25 : vector<8x128xf32>
    %c0_15 = arith.constant 0 : index
    %c0_16 = arith.constant 0 : index
    %27 = vector.load %arg8[%c0_15, %c0_16] : memref<8x128xf32, #tpu.memory_space<vmem>>, vector<8x128xf32>
    tpu.vector_store %arg8[%c0_15, %c0_16], %26 {strides = array<i32>} : memref<8x128xf32, #tpu.memory_space<vmem>>, vector<8x128xf32>,
    return
  }
  func.func @transform_0(%arg0: i32) -> (i32, i32) {
    %c0_i32 = arith.constant 0 : i32
    %c0_i32_0 = arith.constant 0 : i32
    return %arg0, %c0_i32 : i32, i32
  }
  func.func @transform_1(%arg0: i32) -> (i32, i32) {
    %c0_i32 = arith.constant 0 : i32
    %c0_i32_0 = arith.constant 0 : i32
    %c0_i32_1 = arith.constant 0 : i32
    return %c0_i32, %c0_i32_0 : i32, i32
  }
  func.func @transform_2(%arg0: i32) -> (i32, i32) {
    %c0_i32 = arith.constant 0 : i32
    %c0_i32_0 = arith.constant 0 : i32
    %c0_i32_1 = arith.constant 0 : i32
    return %c0_i32, %c0_i32_0 : i32, i32
  }
  func.func @transform_3(%arg0: i32) -> (i32, i32) {
    %c0_i32 = arith.constant 0 : i32
    %c0_i32_0 = arith.constant 0 : i32
    %c0_i32_1 = arith.constant 0 : i32
    return %c0_i32, %c0_i32_0 : i32, i32
  }
  func.func @transform_4(%arg0: i32) -> (i32, i32) {
    %c0_i32 = arith.constant 0 : i32
    %c0_i32_0 = arith.constant 0 : i32
    %c0_i32_1 = arith.constant 0 : i32
    return %c0_i32, %c0_i32_0 : i32, i32
  }
  func.func @transform_5(%arg0: i32) -> (i32, i32) {
    %c0_i32 = arith.constant 0 : i32
    %c0_i32_0 = arith.constant 0 : i32
    %c0_i32_1 = arith.constant 0 : i32
    return %c0_i32, %c0_i32_0 : i32, i32
  }
  func.func @transform_6(%arg0: i32) -> (i32, i32) {
    %c0_i32 = arith.constant 0 : i32
    %c0_i32_0 = arith.constant 0 : i32
    %c0_i32_1 = arith.constant 0 : i32
    return %c0_i32, %c0_i32_0 : i32, i32
  }
  func.func @transform_7(%arg0: i32) -> (i32, i32) {
    %c0_i32 = arith.constant 0 : i32
    %c0_i32_0 = arith.constant 0 : i32
    return %arg0, %c0_i32 : i32, i32
  }
}

</mosaic_0001>

<llo_original>
// kernel: tpu_custom_call.1
$region0: #{tpu_custom_call.1}
  #allocation0 [shape = 'u32[]', space=smem, size = 0x4, offset = 0x4, fixed_abs, tag = 'smem constant byte address 0x4 - core index']
  #allocation1 [shape = 'u32[72,128]{1,0:T(1,128)}', space=vmem, size = 0x9000, scoped, tag = 'internal scratch']
  %s0 = inlined_call_operand.vmem [shape: f32[16,1], index: 0, kind: input, shape index: {}]
  %s1 = inlined_call_operand.vmem [shape: f32[1,8], index: 1, kind: input, shape index: {}]
  %s2 = inlined_call_operand.vmem [shape: f32[1,8], index: 2, kind: input, shape index: {}]
  %s3 = inlined_call_operand.vmem [shape: bf16[8,128], index: 3, kind: input, shape index: {}]
  %s4 = inlined_call_operand.vmem [shape: f32[1,128], index: 4, kind: input, shape index: {}]
  %s5 = inlined_call_operand.hbm [shape: bf16[128,128], index: 5, kind: input, shape index: {}]
  %s6 = inlined_call_operand.vmem [shape: f32[1,128], index: 6, kind: input, shape index: {}]
  %s7 = inlined_call_operand.hbm [shape: f32[16,128], index: 7, kind: output, shape index: {}]
  %s8 = sld [smem:[#allocation0]]
  $region65: #{tpu_custom_call.1} parent=0
    _
  %s10 = ssub.s32 1, %s8
  %s11 = scalar_select 0, %s10, %s8
  $region1: #{tpu_custom_call.1} parent=0
    #allocation2 [shape = 'u8[32768]{0}', space=vmem, size = 0x8000, scoped, tag = 'input window, operand 5, single buffered']
    #allocation3 [shape = 's32[2]{0}', space=sflag, size = 0x8, scoped, tag = 'scoped memory for tpu_custom_call.1']
    #allocation4 [shape = 's32[2]{0}', space=sflag, size = 0x8, scoped, tag = 'scoped memory for tpu_custom_call.1']
    #allocation5 [shape = 'u8[8192]{0}', space=vmem, size = 0x2000, scoped, tag = 'output window, operand 0']
    %12 = vsyncpa [#allocation3], 0
    %13 = vsyncpa [#allocation4], 0
    %s14 = scalar_lea.sflag [#allocation4], 1
    %15 = vsyncpa %s14, 0
    loop: start=0, step=1, limit=4
    $region2: #{tpu_custom_call.1} parent=1 // loop_pre_header
      _
    $region3: #{tpu_custom_call.1} parent=1 // loop_header
      %s17 = sphi 0, %s21
      %p18 = scmp.ge.s32.totalorder %s17, 4
      %s27 = sphi 0, %s29
      %s30 = sphi 0, %s27
      %s31 = sphi 0, %s30
      %s47 = sphi 0, %s31
      %s51 = sphi 0, %s51
      %s53 = sphi 0, %s51
      %s54 = sphi 0, %s53
      %s68 = sphi 0, %s54
      %s72 = sphi 0, %s72
      %s74 = sphi 0, %s72
      %s75 = sphi 0, %s74
      %s89 = sphi 0, %s75
      %s93 = sphi 0, %s93
      %s95 = sphi 0, %s93
      %s96 = sphi 0, %s95
      %s110 = sphi 0, %s96
      %s114 = sphi 0, %s114
      %s116 = sphi 0, %s114
      %s117 = sphi 0, %s116
      %s131 = sphi 0, %s117
      %s135 = sphi 0, %s135
      %s137 = sphi 0, %s135
      %s138 = sphi 0, %s137
      %s152 = sphi 0, %s138
      %s156 = sphi 0, %s156
      %s158 = sphi 0, %s156
      %s159 = sphi 0, %s158
      %s173 = sphi 0, %s159
      %s179 = sphi 0, %s181
      %s182 = sphi 0, %s179
      %s183 = sphi 0, %s182
      %s199 = sphi 0, %s183
    $region4: #{tpu_custom_call.1} parent=1 // loop_header_branch
      %20 = sbr.rel (%p18) target = $region8
    $region5: #{tpu_custom_call.1} parent=1 // loop_body
      %s22 = ssub.s32 %s17, 1
      %s23 = ssub.s32 %s17, 2
      %s24 = sadd.s32 %s17, 1
      %s25 = ssub.s32 %s17, %s24
      %p26 = scmp.eq.s32.totalorder %s25, 0
      %s28 = sadd.s32 %s27, 1
      %s29 = scalar_select %p26, %s27, %s28
      %p32 = pneg %p26
      %p33 = scmp.eq.s32.totalorder %s17, 1
      %p34 = por %p32, %p33
      %p35 = scmp.ne.s32.totalorder %s27, %s30
      %p36 = scmp.eq.s32.totalorder %s17, 0
      %p37 = por %p35, %p36
      %p38 = scmp.ne.s32.totalorder %s27, %s30
      %p39 = scmp.eq.s32.totalorder %s22, 1
      %p40 = por %p38, %p39
      %p41 = scmp.ne.s32.totalorder %s30, %s31
      %p42 = scmp.eq.s32.totalorder %s22, 0
      %p43 = por %p41, %p42
      %p44 = scmp.ne.s32.totalorder %s30, %s31
      %p45 = scmp.eq.s32.totalorder %s23, 1
      %p46 = por %p44, %p45
      %p48 = scmp.ne.s32.totalorder %s31, %s47
      %p49 = scmp.eq.s32.totalorder %s23, 0
      %p50 = por %p48, %p49
      %s52 = sadd.s32 %s51, 1
      %p55 = scmp.eq.s32.totalorder %s17, 1
      %p56 = scmp.ne.s32.totalorder %s51, %s53
      %p57 = scmp.eq.s32.totalorder %s17, 0
      %p58 = por %p56, %p57
      %p59 = scmp.ne.s32.totalorder %s51, %s53
      %p60 = scmp.eq.s32.totalorder %s22, 1
      %p61 = por %p59, %p60
      %p62 = scmp.ne.s32.totalorder %s53, %s54
      %p63 = scmp.eq.s32.totalorder %s22, 0
      %p64 = por %p62, %p63
      %p65 = scmp.ne.s32.totalorder %s53, %s54
      %p66 = scmp.eq.s32.totalorder %s23, 1
      %p67 = por %p65, %p66
      %p69 = scmp.ne.s32.totalorder %s54, %s68
      %p70 = scmp.eq.s32.totalorder %s23, 0
      %p71 = por %p69, %p70
      %s73 = sadd.s32 %s72, 1
      %p76 = scmp.eq.s32.totalorder %s17, 1
      %p77 = scmp.ne.s32.totalorder %s72, %s74
      %p78 = scmp.eq.s32.totalorder %s17, 0
      %p79 = por %p77, %p78
      %p80 = scmp.ne.s32.totalorder %s72, %s74
      %p81 = scmp.eq.s32.totalorder %s22, 1
      %p82 = por %p80, %p81
      %p83 = scmp.ne.s32.totalorder %s74, %s75
      %p84 = scmp.eq.s32.totalorder %s22, 0
      %p85 = por %p83, %p84
      %p86 = scmp.ne.s32.totalorder %s74, %s75
      %p87 = scmp.eq.s32.totalorder %s23, 1
      %p88 = por %p86, %p87
      %p90 = scmp.ne.s32.totalorder %s75, %s89
      %p91 = scmp.eq.s32.totalorder %s23, 0
      %p92 = por %p90, %p91
      %s94 = sadd.s32 %s93, 1
      %p97 = scmp.eq.s32.totalorder %s17, 1
      %p98 = scmp.ne.s32.totalorder %s93, %s95
      %p99 = scmp.eq.s32.totalorder %s17, 0
      %p100 = por %p98, %p99
      %p101 = scmp.ne.s32.totalorder %s93, %s95
      %p102 = scmp.eq.s32.totalorder %s22, 1
      %p103 = por %p101, %p102
      %p104 = scmp.ne.s32.totalorder %s95, %s96
      %p105 = scmp.eq.s32.totalorder %s22, 0
      %p106 = por %p104, %p105
      %p107 = scmp.ne.s32.totalorder %s95, %s96
      %p108 = scmp.eq.s32.totalorder %s23, 1
      %p109 = por %p107, %p108
      %p111 = scmp.ne.s32.totalorder %s96, %s110
      %p112 = scmp.eq.s32.totalorder %s23, 0
      %p113 = por %p111, %p112
      %s115 = sadd.s32 %s114, 1
      %p118 = scmp.eq.s32.totalorder %s17, 1
      %p119 = scmp.ne.s32.totalorder %s114, %s116
      %p120 = scmp.eq.s32.totalorder %s17, 0
      %p121 = por %p119, %p120
      %p122 = scmp.ne.s32.totalorder %s114, %s116
      %p123 = scmp.eq.s32.totalorder %s22, 1
      %p124 = por %p122, %p123
      %p125 = scmp.ne.s32.totalorder %s116, %s117
      %p126 = scmp.eq.s32.totalorder %s22, 0
      %p127 = por %p125, %p126
      %p128 = scmp.ne.s32.totalorder %s116, %s117
      %p129 = scmp.eq.s32.totalorder %s23, 1
      %p130 = por %p128, %p129
      %p132 = scmp.ne.s32.totalorder %s117, %s131
      %p133 = scmp.eq.s32.totalorder %s23, 0
      %p134 = por %p132, %p133
      %s136 = sadd.s32 %s135, 1
      %p139 = scmp.eq.s32.totalorder %s17, 1
      %p140 = scmp.ne.s32.totalorder %s135, %s137
      %p141 = scmp.eq.s32.totalorder %s17, 0
      %p142 = por %p140, %p141
      %p143 = scmp.ne.s32.totalorder %s135, %s137
      %p144 = scmp.eq.s32.totalorder %s22, 1
      %p145 = por %p143, %p144
      %p146 = scmp.ne.s32.totalorder %s137, %s138
      %p147 = scmp.eq.s32.totalorder %s22, 0
      %p148 = por %p146, %p147
      %p149 = scmp.ne.s32.totalorder %s137, %s138
      %p150 = scmp.eq.s32.totalorder %s23, 1
      %p151 = por %p149, %p150
      %p153 = scmp.ne.s32.totalorder %s138, %s152
      %p154 = scmp.eq.s32.totalorder %s23, 0
      %p155 = por %p153, %p154
      %s157 = sadd.s32 %s156, 1
      %p160 = scmp.eq.s32.totalorder %s17, 1
      %p161 = scmp.ne.s32.totalorder %s156, %s158
      %p162 = scmp.eq.s32.totalorder %s17, 0
      %p163 = por %p161, %p162
      %p164 = scmp.ne.s32.totalorder %s156, %s158
      %p165 = scmp.eq.s32.totalorder %s22, 1
      %p166 = por %p164, %p165
      %p167 = scmp.ne.s32.totalorder %s158, %s159
      %p168 = scmp.eq.s32.totalorder %s22, 0
      %p169 = por %p167, %p168
      %p170 = scmp.ne.s32.totalorder %s158, %s159
      %p171 = scmp.eq.s32.totalorder %s23, 1
      %p172 = por %p170, %p171
      %p174 = scmp.ne.s32.totalorder %s159, %s173
      %p175 = scmp.eq.s32.totalorder %s23, 0
      %p176 = por %p174, %p175
      %s177 = ssub.s32 %s17, %s24
      %p178 = scmp.eq.s32.totalorder %s177, 0
      %s180 = sadd.s32 %s179, 1
      %s181 = scalar_select %p178, %s179, %s180
      %p184 = pneg %p178
      %p185 = scmp.eq.s32.totalorder %s17, 1
      %p186 = por %p184, %p185
      %p187 = scmp.ne.s32.totalorder %s179, %s182
      %p188 = scmp.eq.s32.totalorder %s17, 0
      %p189 = por %p187, %p188
      %p190 = scmp.ne.s32.totalorder %s179, %s182
      %p191 = scmp.eq.s32.totalorder %s22, 1
      %p192 = por %p190, %p191
      %p193 = scmp.ne.s32.totalorder %s182, %s183
      %p194 = scmp.eq.s32.totalorder %s22, 0
      %p195 = por %p193, %p194
      %p196 = scmp.ne.s32.totalorder %s182, %s183
      %p197 = scmp.eq.s32.totalorder %s23, 1
      %p198 = por %p196, %p197
      %p200 = scmp.ne.s32.totalorder %s183, %s199
      %p201 = scmp.eq.s32.totalorder %s23, 0
      %p202 = por %p200, %p201
      %p203 = scmp.le.s32.totalorder 1, %s17
      %p204 = scmp.lt.s32.totalorder %s17, 3
      %p205 = pnand %p203, %p204
      %p206 = pneg %p205
      // Predicated region
      $region9: #{tpu_custom_call.1} parent=5 // pred_check
        _
      $region10: #{tpu_custom_call.1} parent=5 // pred_check_branch
        %208 = sbr.rel (%p205) target = $region12
      $region11: #{tpu_custom_call.1} parent=5 // pred_region
        %s209 = ssub.s32 %s17, 1
        // Predicated region
        $region13: #{tpu_custom_call.1} parent=11 // pred_check
          %p210 = pneg %p64
        $region14: #{tpu_custom_call.1} parent=11 // pred_check_branch
          %212 = sbr.rel (%p210) target = $region16
        $region15: #{tpu_custom_call.1} parent=11 // pred_region
          _
        $region16: #{tpu_custom_call.1} parent=11 // pred_fallthru
          _
        // Predicated region
        $region17: #{tpu_custom_call.1} parent=11 // pred_check
          %p213 = pneg %p85
        $region18: #{tpu_custom_call.1} parent=11 // pred_check_branch
          %215 = sbr.rel (%p213) target = $region20
        $region19: #{tpu_custom_call.1} parent=11 // pred_region
          _
        $region20: #{tpu_custom_call.1} parent=11 // pred_fallthru
          _
        // Predicated region
        $region21: #{tpu_custom_call.1} parent=11 // pred_check
          %p216 = pneg %p106
        $region22: #{tpu_custom_call.1} parent=11 // pred_check_branch
          %218 = sbr.rel (%p216) target = $region24
        $region23: #{tpu_custom_call.1} parent=11 // pred_region
          _
        $region24: #{tpu_custom_call.1} parent=11 // pred_fallthru
          _
        // Predicated region
        $region25: #{tpu_custom_call.1} parent=11 // pred_check
          %p219 = pneg %p127
        $region26: #{tpu_custom_call.1} parent=11 // pred_check_branch
          %221 = sbr.rel (%p219) target = $region28
        $region27: #{tpu_custom_call.1} parent=11 // pred_region
          _
        $region28: #{tpu_custom_call.1} parent=11 // pred_fallthru
          _
        // Predicated region
        $region29: #{tpu_custom_call.1} parent=11 // pred_check
          %p222 = pneg %p148
        $region30: #{tpu_custom_call.1} parent=11 // pred_check_branch
          %224 = sbr.rel (%p222) target = $region32
        $region31: #{tpu_custom_call.1} parent=11 // pred_region
          %226 = vsyncadd [#allocation3], 0
          %s227 = sshll.u32 %s5, 4
          %s228 = int_to_ptr.hbm [resolvable:$true] %s227
          %s229 = sshll.u32 [#allocation2], 4
          %s230 = int_to_ptr.vmem [resolvable:$true] %s229
          %235 = dma.hbm_to_vmem [thread:$0]  %s228, 1024, %s230, [#allocation3], 64, 64, 4
        $region32: #{tpu_custom_call.1} parent=11 // pred_fallthru
          _
        // Predicated region
        $region33: #{tpu_custom_call.1} parent=11 // pred_check
          %p236 = pneg %p169
        $region34: #{tpu_custom_call.1} parent=11 // pred_check_branch
          %238 = sbr.rel (%p236) target = $region36
        $region35: #{tpu_custom_call.1} parent=11 // pred_region
          _
        $region36: #{tpu_custom_call.1} parent=11 // pred_fallthru
          _
      $region12: #{tpu_custom_call.1} parent=5 // pred_fallthru
        _
      %p239 = scmp.lt.s32.totalorder %s17, 2
      // Predicated region
      $region37: #{tpu_custom_call.1} parent=5 // pred_check
        %p240 = pneg %p239
      $region38: #{tpu_custom_call.1} parent=5 // pred_check_branch
        %242 = sbr.rel (%p240) target = $region40
      $region39: #{tpu_custom_call.1} parent=5 // pred_region
        // Predicated region
        $region41: #{tpu_custom_call.1} parent=39 // pred_check
          %p243 = pneg %p37
        $region42: #{tpu_custom_call.1} parent=39 // pred_check_branch
          %245 = sbr.rel (%p243) target = $region44
        $region43: #{tpu_custom_call.1} parent=39 // pred_region
          %p246 = scmp.lt.s32.totalorder %s17, 1
          %s247 = scalar_select %p246, %s17, 1
          %s248 = smul.addr %s247, 8
          %s249 = scalar_lea.vmem %s0, %s248
        $region44: #{tpu_custom_call.1} parent=39 // pred_fallthru
          _
      $region40: #{tpu_custom_call.1} parent=5 // pred_fallthru
        _
      %p250 = scmp.le.s32.totalorder 1, %s17
      %p251 = scmp.lt.s32.totalorder %s17, 3
      %p252 = pnand %p250, %p251
      %p253 = pneg %p252
      // Predicated region
      $region45: #{tpu_custom_call.1} parent=5 // pred_check
        _
      $region46: #{tpu_custom_call.1} parent=5 // pred_check_branch
        %255 = sbr.rel (%p252) target = $region48
      $region47: #{tpu_custom_call.1} parent=5 // pred_region
        %s256 = ssub.s32 %s17, 1
        // Predicated region
        $region49: #{tpu_custom_call.1} parent=47 // pred_check
          %p257 = pneg %p148
        $region50: #{tpu_custom_call.1} parent=47 // pred_check_branch
          %259 = sbr.rel (%p257) target = $region52
        $region51: #{tpu_custom_call.1} parent=47 // pred_region
          %261 = dma.done [#allocation3], 1024
        $region52: #{tpu_custom_call.1} parent=47 // pred_fallthru
          _
        %p262 = scmp.lt.s32.totalorder %s22, 1
        %s263 = scalar_select %p262, %s22, 1
        %s264 = smul.addr %s263, 8
        %s265 = scalar_lea.vmem %s0, %s264
        %p266 = pneg %p43
        %p267 = pneg %p40
        %p268 = pneg %p64
        %p269 = pneg %p61
        %p270 = pneg %p85
        %p271 = pneg %p82
        %p272 = pneg %p106
        %p273 = pneg %p103
        %p274 = pneg %p127
        %p275 = pneg %p124
        %p276 = pneg %p148
        %p277 = pneg %p145
        %p278 = pneg %p169
        %p279 = pneg %p166
        %p280 = pneg %p195
        %p281 = pneg %p192
        %s282 = sand.u32 %s182, 1
        %s283 = scalar_lea.sflag [#allocation4], %s282
        %s284 = sand.u32 %s182, 1
        %s285 = smul.addr %s284, 8
        %s286 = scalar_lea.vmem [#allocation5], %s285
        %p287 = scmp.lt.s32.totalorder %s22, 1
        %s288 = scalar_select %p287, %s22, 1
        %s289 = smul.addr %s288, 8
        %s290 = scalar_lea.vmem %s0, %s289
        %v292 = vld [vmem:[%s290] sm:$0xff]
        %v293 = vld [vmem:[%s1] sm:$0x1]
        %295 = vset.pattern.permute.xlu0 0
        %296 = vperm.xlu0 %295, %v292
        %v297 = vpop.permute.xlu0 %296
        %v300 = vperm.slane %v293, 0
        %v302 = vmul.f32 %v297, %v300
        %v303 = vld [vmem:[%s2] sm:$0x1]
        %v305 = vperm.slane %v303, 0
        %v307 = vadd.f32 %v302, %v305
        %v308 = vand.u32 2147483647, %v307
        %vm309 = vcmp.le.f32.partialorder %v308, 0.7853982
        %vm310 = vcmp.lt.s32.totalorder %v307, 0
        %v311 = vand.u32 %v307, 2139095040
        %v312 = vshrl.u32 %v311, 23
        %v313 = vsub.s32 %v312, 127
        %v314 = vand.u32 2147483647, %v307
        %v315 = vand.u32 %v314, 8388607
        %v316 = vor.u32 %v315, 8388608
        %v317 = vsub.s32 0, %v316
        %v318 = vadd.s32 %v313, 1
        %vm319 = vcmp.gt.s32.totalorder %v318, 0
        %v320 = vsel %vm319, %v318, 0
        %v321 = vshrl.u32 %v320, 5
        %v322 = vand.u32 %v320, 31
        %v323 = vsub.s32 32, %v322
        %v324 = vshrl.u32 683565275, %v323
        %v325 = vshll.u32 683565275, %v322
        %v326 = vshrl.u32 2475754826, %v323
        %v327 = vor.u32 %v325, %v326
        %v328 = vshll.u32 2475754826, %v322
        %v329 = vshrl.u32 2131351028, %v323
        %v330 = vor.u32 %v328, %v329
        %v331 = vshll.u32 2131351028, %v322
        %v332 = vshrl.u32 2102212464, %v323
        %v333 = vor.u32 %v331, %v332
        %v334 = vshll.u32 2102212464, %v322
        %v335 = vshrl.u32 920167782, %v323
        %v336 = vor.u32 %v334, %v335
        %v337 = vshll.u32 920167782, %v322
        %v338 = vshrl.u32 1326507024, %v323
        %v339 = vor.u32 %v337, %v338
        %vm340 = vcmp.lt.s32.totalorder %v321, 1
        %vm341 = vcmp.lt.s32.totalorder %v321, 2
        %vm342 = vcmp.lt.s32.totalorder %v321, 3
        %vm343 = vcmp.lt.s32.totalorder %v321, 4
        %v344 = vsel %vm340, %v324, %v327
        %v345 = vsel %vm343, %v333, 2102212464
        %v346 = vsel %vm342, %v330, %v345
        %v347 = vsel %vm341, %v344, %v346
        %v348 = vsel %vm340, %v327, %v330
        %v349 = vsel %vm343, %v336, 920167782
        %v350 = vsel %vm342, %v333, %v349
        %v351 = vsel %vm341, %v348, %v350
        %v352 = vsel %vm340, %v330, %v333
        %v353 = vsel %vm343, %v339, 1326507024
        %v354 = vsel %vm342, %v336, %v353
        %v355 = vsel %vm341, %v352, %v354
        %v356 = vshll.u32 %v316, 8
        %v357 = vand.u32 %v356, 65535
        %v358 = vshrl.u32 %v356, 16
        %v359 = vand.u32 %v355, 65535
        %v360 = vshrl.u32 %v355, 16
        %v361 = vmul.u32 %v357, %v359
        %v362 = vmul.u32 %v357, %v360
        %v363 = vmul.u32 %v358, %v359
        %v364 = vmul.u32 %v358, %v360
        %v365 = vshll.u32 %v362, 16
        %v366 = vshrl.u32 %v362, 16
        %v367 = vshll.u32 %v363, 16
        %v368 = vshrl.u32 %v363, 16
        %vm369 = vc.u32 %v361, %v365
        %v370 = vsel %vm369, 1, 0
        %v371 = vadd.s32 %v361, %v365
        %v372 = vadd.s32 %v364, %v370
        %vm373 = vc.u32 %v371, %v367
        %v374 = vsel %vm373, 1, 0
        %v375 = vadd.s32 %v371, %v367
        %v376 = vadd.s32 %v372, %v374
        %v377 = vadd.s32 %v376, %v366
        %v378 = vadd.s32 %v377, %v368
        %v379 = vand.u32 %v356, 65535
        %v380 = vshrl.u32 %v356, 16
        %v381 = vand.u32 %v351, 65535
        %v382 = vshrl.u32 %v351, 16
        %v383 = vmul.u32 %v379, %v381
        %v384 = vmul.u32 %v379, %v382
        %v385 = vmul.u32 %v380, %v381
        %v386 = vmul.u32 %v380, %v382
        %v387 = vshll.u32 %v384, 16
        %v388 = vshrl.u32 %v384, 16
        %v389 = vshll.u32 %v385, 16
        %v390 = vshrl.u32 %v385, 16
        %vm391 = vc.u32 %v383, %v387
        %v392 = vsel %vm391, 1, 0
        %v393 = vadd.s32 %v383, %v387
        %v394 = vadd.s32 %v386, %v392
        %vm395 = vc.u32 %v393, %v389
        %v396 = vsel %vm395, 1, 0
        %v397 = vadd.s32 %v393, %v389
        %v398 = vadd.s32 %v394, %v396
        %v399 = vadd.s32 %v398, %v388
        %v400 = vadd.s32 %v399, %v390
        %v401 = vmul.u32 %v356, %v347
        %v402 = vadd.s32 %v378, %v397
        %vm403 = vc.u32 %v378, %v397
        %v404 = vadd.s32 %v400, 1
        %v405 = vsel %vm403, %v404, %v400
        %v406 = vadd.s32 %v401, %v405
        %v407 = vadd.s32 %v406, 536870912
        %v408 = vshrl.u32 %v407, 30
        %v409 = vshll.u32 %v408, 30
        %v410 = vsub.s32 %v406, %v409
        %vm411 = vcmp.lt.s32.totalorder %v410, 0
        %v412 = vsub.s32 0, %v410
        %v413 = vsel %vm411, %v412, %v410
        %v414 = vclz %v413
        %v415 = vsub.s32 %v414, 2
        %vm416 = vcmp.gt.s32.totalorder 0, %v415
        %v417 = vsel %vm416, 0, %v415
        %v418 = vsub.s32 32, %v417
        %v419 = vshll.u32 %v410, %v417
        %v420 = vshrl.u32 %v402, %v418
        %v421 = vor.u32 %v419, %v420
        %v422 = vsub.s32 4294967266, %v417
        %v423 = vadd.s32 %v422, 127
        %v424 = vshll.u32 %v423, 23
        %v425 = vor.u32 4788187, %v424
        %v426 = vand.u32 2147483647, %v425
        %v428 = vcvt.s32.f32 %v421
        %v429 = vmul.f32 %v428, %v426
        %v430 = vxor.u32 %v429, 2147483648
        %v431 = vsel %vm310, %v430, %v429
        %v432 = vsub.s32 4, %v408
        %v433 = vsel %vm310, %v432, %v408
        %v434 = vsel %vm309, %v307, %v431
        %v435 = vsel %vm309, 0, %v433
        %v436 = vmul.f32 %v434, %v434
        %v437 = vmul.f32 %v436, -0.001358992
        %v438 = vadd.f32 %v437, 0.041655596
        %v439 = vmul.f32 %v436, %v438
        %v440 = vadd.f32 %v439, -0.4999988
        %v441 = vmul.f32 %v436, %v440
        %v442 = vadd.f32 1.0, %v441
        %v443 = vmul.f32 %v434, %v434
        %v444 = vmul.f32 %v443, -0.00019511016
        %v445 = vadd.f32 %v444, 0.008332121
        %v446 = vmul.f32 %v443, %v445
        %v447 = vadd.f32 %v446, -0.16666654
        %v448 = vmul.f32 %v443, %v447
        %v449 = vadd.f32 %v448, 1.0
        %v450 = vmul.f32 %v449, %v434
        %vm451 = vweird.f32 %v307
        %v452 = vadd.s32 %v435, 3
        %v453 = vand.u32 %v452, 3
        %vm454 = vcmp.lt.s32.totalorder %v453, 2
        %vm455 = vcmp.eq.s32.totalorder %v453, 0
        %v456 = vxor.u32 %v450, 2147483648
        %v457 = vsel %vm455, %v442, %v456
        %vm458 = vcmp.eq.s32.totalorder %v453, 2
        %v459 = vxor.u32 %v442, 2147483648
        %v460 = vsel %vm458, %v459, %v450
        %v461 = vsel %vm454, %v457, %v460
        %v462 = vsel %vm451, nan, %v461
        %v463 = vpack.c.bf16 %v462, %v462
        %v464 = vld [vmem:[%s3] sm:$0xf]
        %v465 = vld [vmem:[%s4] sm:$0x1]
        %v467 = vperm.slane %v465, 0
        %vm469 = vcmask 64512
        %v471 = vsel %vm469, %v463, 0
        %vm473 = vcmask 1043456
        %v475 = vsel %vm473, %v464, 0
        %477 = vmatpush.bf16.msra.mxu0 0
        %478 = vmatpush.bf16.msra.mxu0 0
        %479 = vmatpush.bf16.msra.mxu0 0
        %480 = vmatpush.bf16.msra.mxu0 0
        %481 = vmatpush.bf16.msra.mxu0 0
        %482 = vmatpush.bf16.msra.mxu0 0
        %483 = vmatpush.bf16.msra.mxu0 0
        %484 = vmatpush.bf16.msra.mxu0 %v475
        %485 = vmatmul.bf16.gmra.mxu0 %v471
        %v486 = vpop.f32.mrf.mxu0
        %v487 = vadd.f32 %v467, %v486
        %v488 = vpop.f32.mrf.mxu0
        %489 = vdwg.mxu0
        %v490 = vxor.u32 %v487, 2147483648
        %v491 = vmul.f32 %v490, 1.442695
        %v492 = vpow.pop %v491
        %v493 = vadd.f32 %v492, 1.0
        %v494 = vrcp.pop %v493
        %v495 = vmul.f32 %v493, %v494
        %v496 = vsub.f32 1.0, %v495
        %v497 = vmul.f32 %v494, %v496
        %v498 = vadd.f32 %v494, %v497
        %vm499 = vweird.f32 %v493
        %vm500 = vweird.f32 %v494
        %vm501 = vmor %vm499, %vm500
        %v502 = vsel %vm501, %v494, %v498
        %v503 = vand.u32 2147483647, %v493
        %vm504 = vcmp.eq.f32.partialorder %v503, 8.507059e+37
        %v505 = vand.u32 %v493, 2147483648
        %v506 = vor.u32 1.1754944e-38, %v505
        %v507 = vsel %vm504, %v506, %v502
        %v508 = vmul.f32 1.0, %v507
        %v509 = vmul.f32 %v487, %v508
        %v510 = vpack.c.bf16 %v509, %v509
        %v511 = vld [vmem:[#allocation2] sm:$0xf]
        %v512 = vld [vmem:[#allocation2 + $0x4] sm:$0xf]
        %v513 = vld [vmem:[#allocation2 + $0x8] sm:$0xf]
        %v514 = vld [vmem:[#allocation2 + $0xc] sm:$0xf]
        %v515 = vld [vmem:[#allocation2 + $0x10] sm:$0xf]
        %v516 = vld [vmem:[#allocation2 + $0x14] sm:$0xf]
        %v517 = vld [vmem:[#allocation2 + $0x18] sm:$0xf]
        %v518 = vld [vmem:[#allocation2 + $0x1c] sm:$0xf]
        %v519 = vld [vmem:[#allocation2 + $0x20] sm:$0xf]
        %v520 = vld [vmem:[#allocation2 + $0x24] sm:$0xf]
        %v521 = vld [vmem:[#allocation2 + $0x28] sm:$0xf]
        %v522 = vld [vmem:[#allocation2 + $0x2c] sm:$0xf]
        %v523 = vld [vmem:[#allocation2 + $0x30] sm:$0xf]
        %v524 = vld [vmem:[#allocation2 + $0x34] sm:$0xf]
        %v525 = vld [vmem:[#allocation2 + $0x38] sm:$0xf]
        %v526 = vld [vmem:[#allocation2 + $0x3c] sm:$0xf]
        %v527 = vld [vmem:[%s6] sm:$0x1]
        %v529 = vperm.slane %v527, 0
        %v547 = vunpack.c.l.b16 %v511
        %v548 = vunpack.c.l.b16 %v512
        %v549 = vunpack.c.l.b16 %v513
        %v550 = vunpack.c.l.b16 %v514
        %v551 = vunpack.c.l.b16 %v515
        %v552 = vunpack.c.l.b16 %v516
        %v553 = vunpack.c.l.b16 %v517
        %v554 = vunpack.c.l.b16 %v518
        %v555 = vunpack.c.l.b16 %v519
        %v556 = vunpack.c.l.b16 %v520
        %v557 = vunpack.c.l.b16 %v521
        %v558 = vunpack.c.l.b16 %v522
        %v559 = vunpack.c.l.b16 %v523
        %v560 = vunpack.c.l.b16 %v524
        %v561 = vunpack.c.l.b16 %v525
        %v562 = vunpack.c.l.b16 %v526
        %v563 = vpack.c.b16 %v548, %v547
        %v564 = vpack.c.b16 %v550, %v549
        %v565 = vpack.c.b16 %v552, %v551
        %v566 = vpack.c.b16 %v554, %v553
        %v567 = vpack.c.b16 %v556, %v555
        %v568 = vpack.c.b16 %v558, %v557
        %v569 = vpack.c.b16 %v560, %v559
        %v570 = vpack.c.b16 %v562, %v561
        %579 = vmatpush.bf16.msra.mxu0 %v570
        %580 = vmatpush.bf16.msra.mxu0 %v569
        %581 = vmatpush.bf16.msra.mxu0 %v568
        %582 = vmatpush.bf16.msra.mxu0 %v567
        %583 = vmatpush.bf16.msra.mxu0 %v566
        %584 = vmatpush.bf16.msra.mxu0 %v565
        %585 = vmatpush.bf16.msra.mxu0 %v564
        %586 = vmatpush.bf16.msra.mxu0 %v563
        %587 = vmatmul.bf16.gmra.mxu0 %v510
        %v588 = vpop.f32.mrf.mxu0
        %v589 = vadd.f32 %v529, %v588
        %v590 = vpop.f32.mrf.mxu0
        %591 = vdwg.mxu0
        %592 = vst [vmem:[%s286] sm:$0xff] %v589
        %s593 = sand.u32 %s182, 1
        %s594 = scalar_lea.sflag [#allocation4], %s593
        %s595 = sand.u32 %s182, 1
        %s596 = smul.addr %s595, 8
        %s597 = scalar_lea.vmem [#allocation5], %s596
        // Predicated region
        $region53: #{tpu_custom_call.1} parent=47 // pred_check
          %p598 = pneg %p192
        $region54: #{tpu_custom_call.1} parent=47 // pred_check_branch
          %600 = sbr.rel (%p598) target = $region56
        $region55: #{tpu_custom_call.1} parent=47 // pred_region
          %602 = vsyncadd %s594, 0
          %s603 = smul.addr %s22, 8
          %s604 = scalar_lea.hbm %s7, %s603
          %s606 = sshll.u32 %s597, 4
          %s607 = int_to_ptr.vmem [resolvable:$true] %s606
          %s608 = sshll.u32 %s604, 4
          %s609 = int_to_ptr.hbm [resolvable:$true] %s608
          %611 = dma.vmem_to_hbm [thread:$0]  %s607, 128, %s609, %s594
        $region56: #{tpu_custom_call.1} parent=47 // pred_fallthru
          _
      $region48: #{tpu_custom_call.1} parent=5 // pred_fallthru
        _
      %p612 = scmp.le.s32.totalorder 2, %s17
      // Predicated region
      $region57: #{tpu_custom_call.1} parent=5 // pred_check
        %p613 = pneg %p612
      $region58: #{tpu_custom_call.1} parent=5 // pred_check_branch
        %615 = sbr.rel (%p613) target = $region60
      $region59: #{tpu_custom_call.1} parent=5 // pred_region
        %s616 = ssub.s32 %s17, 2
        // Predicated region
        $region61: #{tpu_custom_call.1} parent=59 // pred_check
          %p617 = pneg %p198
        $region62: #{tpu_custom_call.1} parent=59 // pred_check_branch
          %619 = sbr.rel (%p617) target = $region64
        $region63: #{tpu_custom_call.1} parent=59 // pred_region
          %s620 = sand.u32 %s183, 1
          %s621 = scalar_lea.sflag [#allocation4], %s620
          %s622 = sand.u32 %s183, 1
          %s623 = smul.addr %s622, 8
          %s624 = scalar_lea.vmem [#allocation5], %s623
          %626 = dma.done %s621, 128
        $region64: #{tpu_custom_call.1} parent=59 // pred_fallthru
          _
      $region60: #{tpu_custom_call.1} parent=5 // pred_fallthru
        _
    $region6: #{tpu_custom_call.1} parent=1 // loop_footer
      %s21 = sadd.s32 1, %s17
    $region7: #{tpu_custom_call.1} parent=1 // loop_footer_branch
      %16 = sbr.rel target = $region3
    $region8: #{tpu_custom_call.1} parent=1 // loop_exit
      _
    %627 = vsyncpa [#allocation3], 1
    %s628 = scalar_lea.sflag [#allocation3], 1
    %629 = vsyncpa %s628, 1
    %630 = vsyncpa [#allocation4], 1
    %s631 = scalar_lea.sflag [#allocation4], 1
    %632 = vsyncpa %s631, 1

</llo_original>
